<compile_context>
chip_gen: v5e
topology: v5e:2x2
jax: 0.10.0
libtpu: 0.0.40
codegen_flags: <defaults>
</compile_context>

<pallas_src>
import jax
import jax.numpy as jnp
from jax.experimental import pallas as pl
from jax.experimental.pallas import tpu as pltpu

# ----------------------------- problem sizes -----------------------------
B, C, H, W = 2, 4, 16, 16      # input  [B, C, H, W]  (NCHW, PyTorch convention)
F = 32                         # conv output channels
NUM_CLASSES = 8                # linear head output
KH = KW = 3                    # conv kernel, padding=1 (same)
KKC = KH * KW * C              # 36  : im2col contraction dim
KKC_PAD = 40                   # 36 + bias row + zero pad -> multiple of 8 sublanes
HW = H * W                     # 256 : pixels per image
M = B * HW                     # 512 : lane dim of the hot matmul
LANES = 128                    # lane-dense pooling / logits width


# ------------------------------- kernel ----------------------------------
def wrapper_model_kernel(patch_ref,   # (KKC_PAD, M)   im2col patches (+ ones bias row)
                         wconv_ref,   # (F, KKC_PAD)   normalize+bias-folded conv weight
                         pool_ref,    # (M, LANES)     block-diagonal 1/HW pooling matrix
                         wlin_ref,    # (NUM_CLASSES, F)
                         blin_ref,    # (NUM_CLASSES, 1)
                         out_ref):    # (NUM_CLASSES, LANES)
    # conv3x3 + per-channel normalize + conv bias: ONE im2col MXU matmul, then ReLU.
    acc = jnp.maximum(
        jnp.dot(wconv_ref[...], patch_ref[...], preferred_element_type=jnp.float32),
        0.0)                                                               # (F, M)
    # global average pool per image as a second MXU matmul (reduction off the XLU).
    pooled = jnp.dot(acc, pool_ref[...], preferred_element_type=jnp.float32)  # (F, LANES)
    # linear head, lane-dense single unmasked store.
    out_ref[...] = (jnp.dot(wlin_ref[...], pooled, preferred_element_type=jnp.float32)
                    + blin_ref[...]).astype(out_ref.dtype)


# ------------------------------- wrapper ----------------------------------
@jax.jit
def wrapper_model_normalize(x_nchw, mean, std, w_conv, b_conv, w_lin, b_lin):
    """x_nchw: (B, C, H, W) float32. Returns (B, NUM_CLASSES) float32."""
    x = x_nchw.astype(jnp.float32)

    # --- fold per-channel normalization into the conv weight / bias -------------
    istd = (1.0 / std).astype(jnp.float32)                        # (C,)
    mean_rows = jnp.tile(mean.astype(jnp.float32), KH * KW)       # (36,)
    istd_rows = jnp.tile(istd, KH * KW)                           # (36,)
    # torch Conv2d weight (F,C,KH,KW) -> (F,KH,KW,C) -> (F,36); row r=(kh*KW+kw)*C+c
    w_mat = jnp.transpose(w_conv, (0, 2, 3, 1)).reshape(F, KKC).astype(jnp.float32)
    w_fold = w_mat * istd_rows[None, :]                           # (F, 36)
    # bias must subtract W' @ mean over all 36 rows so the mean-padded border
    # cancels exactly (== reference zero-padding of normalized data).
    b_fold = b_conv.astype(jnp.float32) - w_fold @ mean_rows      # (F,)
    w_ext = jnp.concatenate(
        [w_fold, b_fold[:, None], jnp.zeros((F, KKC_PAD - KKC - 1), jnp.float32)],
        axis=1)                                                   # (F, 40)

    # --- im2col built directly in (KKC, M) order, mean-padded border ------------
    x_pad = jnp.broadcast_to(mean.reshape(1, C, 1, 1).astype(jnp.float32),
                             (B, C, H + 2, W + 2))
    x_pad = x_pad.at[:, :, 1:H + 1, 1:W + 1].set(x)               # (B,C,H+2,W+2)
    x_cb = jnp.transpose(x_pad, (1, 0, 2, 3))                     # (C,B,H+2,W+2)
    taps = jnp.stack([x_cb[:, :, kh:kh + H, kw:kw + W]
                      for kh in range(KH) for kw in range(KW)], axis=0)  # (9,C,B,H,W)
    patches = taps.reshape(KKC, M)                                # (36, 512)
    patches_ext = jnp.concatenate(
        [patches,
         jnp.ones((1, M), jnp.float32),                           # bias row
         jnp.zeros((KKC_PAD - KKC - 1, M), jnp.float32)],         # pad to 40 sublanes
        axis=0)                                                   # (40, 512)

    # --- block-diagonal pooling matrix (constant under jit) ---------------------
    col = jax.lax.broadcasted_iota(jnp.int32, (M, LANES), 1)
    img = jax.lax.broadcasted_iota(jnp.int32, (M, LANES), 0) // HW
    pool_mat = jnp.where(col == img, 1.0 / HW, 0.0).astype(jnp.float32)  # (512, 128)

    w_lin_t = w_lin.astype(jnp.float32).T                         # (NC, F)
    b_lin_col = b_lin.astype(jnp.float32).reshape(NUM_CLASSES, 1)

    vmem = pl.BlockSpec(memory_space=pltpu.MemorySpace.VMEM)
    logits_t = pl.pallas_call(
        wrapper_model_kernel,
        out_shape=jax.ShapeDtypeStruct((NUM_CLASSES, LANES), jnp.float32),
        in_specs=[vmem] * 5,
        out_specs=vmem,
    )(patches_ext, w_ext, pool_mat, w_lin_t, b_lin_col)

    return logits_t[:, :B].T                                      # (B, NC)


# ----------------------- pure-JAX reference (check) ------------------------
def reference(x_nchw, mean, std, w_conv, b_conv, w_lin, b_lin):
    xn = (x_nchw - mean.reshape(1, C, 1, 1)) / std.reshape(1, C, 1, 1)
    y = jax.lax.conv_general_dilated(
        xn, w_conv, window_strides=(1, 1), padding="SAME",
        dimension_numbers=("NCHW", "OIHW", "NCHW"))
    y = y + b_conv.reshape(1, F, 1, 1)
    y = jnp.maximum(y, 0.0)
    pooled = jnp.mean(y, axis=(2, 3))                             # (B, F)
    return pooled @ w_lin + b_lin


# --------------------------------- main ------------------------------------
if __name__ == "__main__":
    key = jax.random.PRNGKey(0)
    kx, kw1, kb1, kw2, kb2 = jax.random.split(key, 5)

    x = jax.random.normal(kx, (B, C, H, W), dtype=jnp.float32)

    # deterministic "preprocess" normalization constants (per channel)
    mean = jnp.array([0.485, 0.456, 0.406, 0.5], dtype=jnp.float32)[:C]
    std = jnp.array([0.229, 0.224, 0.225, 0.25], dtype=jnp.float32)[:C]

    # deterministic model parameters (torch Conv2d weight layout: (F, C, KH, KW))
    w_conv = 0.1 * jax.random.normal(kw1, (F, C, KH, KW), dtype=jnp.float32)
    b_conv = 0.01 * jax.random.normal(kb1, (F,), dtype=jnp.float32)
    w_lin = 0.1 * jax.random.normal(kw2, (F, NUM_CLASSES), dtype=jnp.float32)
    b_lin = 0.01 * jax.random.normal(kb2, (NUM_CLASSES,), dtype=jnp.float32)

    out = wrapper_model_normalize(x, mean, std, w_conv, b_conv, w_lin, b_lin)
    out = jax.block_until_ready(out)

    ref = reference(x, mean, std, w_conv, b_conv, w_lin, b_lin)
    assert out.shape == (B, NUM_CLASSES)
    assert jnp.allclose(out, ref, atol=1e-4, rtol=1e-4), (out, ref)

    print("KERNEL_OK")
</pallas_src>

<mosaic_0001>
module attributes {stable_mosaic.version = 11 : i64} {
  func.func @wrapper_model_kernel(%arg0: memref<40x512xf32, #tpu.memory_space<vmem>>, %arg1: memref<32x40xf32, #tpu.memory_space<vmem>>, %arg2: memref<512x128xf32, #tpu.memory_space<vmem>>, %arg3: memref<8x32xf32, #tpu.memory_space<vmem>>, %arg4: memref<8x1xf32, #tpu.memory_space<vmem>>, %arg5: memref<8x128xf32, #tpu.memory_space<vmem>>) attributes {dimension_semantics = [], scalar_prefetch = 0 : i64, scratch_operands = 0 : i64, tpu.core_type = #tpu.core_type<tc>} {
    %c0 = arith.constant 0 : index
    %c0_0 = arith.constant 0 : index
    %0 = vector.load %arg1[%c0, %c0_0] : memref<32x40xf32, #tpu.memory_space<vmem>>, vector<32x40xf32>
    %c0_1 = arith.constant 0 : index
    %c0_2 = arith.constant 0 : index
    %1 = vector.load %arg0[%c0_1, %c0_2] : memref<40x512xf32, #tpu.memory_space<vmem>>, vector<40x512xf32>
    %cst = arith.constant dense<0.000000e+00> : vector<32x512xf32>
    %2 = tpu.matmul %0, %1, %cst {dimension_numbers = #tpu.dot_dimension_numbers<[1], [0], [0], [1], [0, 0, 1, 1], [], []>} : vector<32x40xf32>, vector<40x512xf32>, vector<32x512xf32> -> vector<32x512xf32>
    %cst_3 = arith.constant 0.000000e+00 : f32
    %3 = vector.broadcast %cst_3 : f32 to vector<32x512xf32>
    %4 = arith.maximumf %2, %3 : vector<32x512xf32>
    %c0_4 = arith.constant 0 : index
    %c0_5 = arith.constant 0 : index
    %5 = vector.load %arg2[%c0_4, %c0_5] : memref<512x128xf32, #tpu.memory_space<vmem>>, vector<512x128xf32>
    %cst_6 = arith.constant dense<0.000000e+00> : vector<32x128xf32>
    %6 = tpu.matmul %4, %5, %cst_6 {dimension_numbers = #tpu.dot_dimension_numbers<[1], [0], [0], [1], [0, 0, 1, 1], [], []>} : vector<32x512xf32>, vector<512x128xf32>, vector<32x128xf32> -> vector<32x128xf32>
    %c0_7 = arith.constant 0 : index
    %c0_8 = arith.constant 0 : index
    %7 = vector.load %arg3[%c0_7, %c0_8] : memref<8x32xf32, #tpu.memory_space<vmem>>, vector<8x32xf32>
    %cst_9 = arith.constant dense<0.000000e+00> : vector<8x128xf32>
    %8 = tpu.matmul %7, %6, %cst_9 {dimension_numbers = #tpu.dot_dimension_numbers<[1], [0], [0], [1], [0, 0, 1, 1], [], []>} : vector<8x32xf32>, vector<32x128xf32>, vector<8x128xf32> -> vector<8x128xf32>
    %c0_10 = arith.constant 0 : index
    %c0_11 = arith.constant 0 : index
    %9 = vector.load %arg4[%c0_10, %c0_11] : memref<8x1xf32, #tpu.memory_space<vmem>>, vector<8x1xf32>
    %10 = vector.broadcast %9 : vector<8x1xf32> to vector<8x128xf32>
    %11 = arith.addf %8, %10 : vector<8x128xf32>
    %c0_12 = arith.constant 0 : index
    %c0_13 = arith.constant 0 : index
    %12 = vector.load %arg5[%c0_12, %c0_13] : memref<8x128xf32, #tpu.memory_space<vmem>>, vector<8x128xf32>
    tpu.vector_store %arg5[%c0_12, %c0_13], %11 {strides = array<i32>} : memref<8x128xf32, #tpu.memory_space<vmem>>, vector<8x128xf32>,
    return
  }
}

</mosaic_0001>

<llo_original>
// kernel: tile.18
$region0: #{tile.18}
  #allocation0 [shape = 's32[1]{0}', space=sflag, size = 0x4, scoped, tag = 'scoped memory for tile.18']
  %s0 = inlined_call_operand.vmem [shape: f32[4], index: 0, kind: input, shape index: {}]
  %s1 = inlined_call_operand.vmem [shape: f32[9,4], index: 1, kind: output, shape index: {}]
  // Predicated region
  $region2: #{tile.18} parent=0 // pred_check
    _
  $region3: #{tile.18} parent=0 // pred_check_branch
    %3 = sbr.rel (0) target = $region5
  $region4: #{tile.18} parent=0 // pred_region
    _
  $region5: #{tile.18} parent=0 // pred_fallthru
    _
  %v4 = vld [vmem:[%s0] ss:$0 sm:$0xff]
  %5 = vst [vmem:[%s1] sm:$0xff] %v4
  %s6 = scalar_lea.vmem %s1, 8
  %7 = vst [vmem:[%s6] sm:$0xff] %v4

// kernel: mul.5
$region0: #{mul.5}
  %s0 = inlined_call_operand.vmem [shape: f32[9,4], index: 0, kind: input, shape index: {}]
  %s1 = inlined_call_operand.vmem [shape: f32[36], index: 1, kind: output, shape index: {}]
  $region1: #{mul.5} parent=0
    #allocation0 [shape = 'u8[4096]{0}', space=vmem, size = 0x1000, scoped, tag = 'scoped mem for output reshape']
    %v2 = vld [vmem:[%s0] sm:$0x1]
    %vm3 = vcmask 31744
    %4 = vst.msk [vmem:[#allocation0] sm:$0x1] %vm3, %v2
    %s5 = scalar_lea.vmem %s0, 8
    %v6 = vld [vmem:[%s5] sm:$0x1]
    %7 = vrot.lane.b32.xlu0 %v6, 32
    %v8 = vpop.permute.xlu0 %7
    %vm9 = vcmask 294144
    %10 = vst.msk [vmem:[#allocation0] sm:$0x1] %vm9, %v8
    %s11 = scalar_lea.vmem %s0, 7
    %v12 = vld [vmem:[%s11] sm:$0x1]
    %13 = vrot.lane.b32.xlu0 %v12, 28
    %v14 = vpop.permute.xlu0 %13
    %vm15 = vcmask 261344
    %16 = vst.msk [vmem:[#allocation0] sm:$0x1] %vm15, %v14
    %s17 = scalar_lea.vmem %s0, 6
    %v18 = vld [vmem:[%s17] sm:$0x1]
    %19 = vrot.lane.b32.xlu0 %v18, 24
    %v20 = vpop.permute.xlu0 %19
    %vm21 = vcmask 228544
    %22 = vst.msk [vmem:[#allocation0] sm:$0x1] %vm21, %v20
    %s23 = scalar_lea.vmem %s0, 5
    %v24 = vld [vmem:[%s23] sm:$0x1]
    %25 = vrot.lane.b32.xlu0 %v24, 20
    %v26 = vpop.permute.xlu0 %25
    %vm27 = vcmask 195744
    %28 = vst.msk [vmem:[#allocation0] sm:$0x1] %vm27, %v26
    %s29 = scalar_lea.vmem %s0, 4
    %v30 = vld [vmem:[%s29] sm:$0x1]
    %31 = vrot.lane.b32.xlu0 %v30, 16
    %v32 = vpop.permute.xlu0 %31
    %vm33 = vcmask 162944
    %34 = vst.msk [vmem:[#allocation0] sm:$0x1] %vm33, %v32
    %s35 = scalar_lea.vmem %s0, 3
    %v36 = vld [vmem:[%s35] sm:$0x1]
    %37 = vrot.lane.b32.xlu0 %v36, 12
    %v38 = vpop.permute.xlu0 %37
    %vm39 = vcmask 130144
    %40 = vst.msk [vmem:[#allocation0] sm:$0x1] %vm39, %v38
    %s41 = scalar_lea.vmem %s0, 2
    %v42 = vld [vmem:[%s41] sm:$0x1]
    %43 = vrot.lane.b32.xlu0 %v42, 8
    %v44 = vpop.permute.xlu0 %43
    %vm45 = vcmask 97344
    %46 = vst.msk [vmem:[#allocation0] sm:$0x1] %vm45, %v44
    %s47 = scalar_lea.vmem %s0, 1
    %v48 = vld [vmem:[%s47] sm:$0x1]
    %49 = vrot.lane.b32.xlu0 %v48, 4
    %v50 = vpop.permute.xlu0 %49
    %vm51 = vcmask 64544
    %52 = vst.msk [vmem:[#allocation0] sm:$0x1] %vm51, %v50
    %s54 = ssub.s32 2, 1
    %v55 = vld [vmem:[#allocation0] sm:%s54]
    %s57 = ssub.s32 2, 1
    %58 = vst [vmem:[%s1] sm:%s57] %v55

// kernel: wrapper_model_normalize.1
$region0: #{wrapper_model_normalize.1}
  #allocation0 [shape = 'u32[]', space=smem, size = 0x4, offset = 0x4, fixed_abs, tag = 'smem constant byte address 0x4 - core index']
  #allocation1 [shape = 'u32[72,128]{1,0:T(1,128)}', space=vmem, size = 0x9000, scoped, tag = 'internal scratch']
  %s0 = inlined_call_operand.vmem [shape: f32[40,512], index: 0, kind: input, shape index: {}]
  %s1 = inlined_call_operand.vmem [shape: f32[32,40], index: 1, kind: input, shape index: {}]
  %s2 = inlined_call_operand.vmem [shape: f32[512,128], index: 2, kind: input, shape index: {}]
  %s3 = inlined_call_operand.vmem [shape: f32[8,32], index: 3, kind: input, shape index: {}]
  %s4 = inlined_call_operand.vmem [shape: f32[8,1], index: 4, kind: input, shape index: {}]
  %s5 = inlined_call_operand.vmem [shape: f32[8,128], index: 5, kind: output, shape index: {}]
  %s6 = sld [smem:[#allocation0]]
  $region30: #{wrapper_model_normalize.1} parent=0
    _
  %s8 = ssub.s32 1, %s6
  %s9 = scalar_select 0, %s8, %s6
  // Predicated region
  $region2: #{wrapper_model_normalize.1} parent=0 // pred_check
    _
  $region3: #{wrapper_model_normalize.1} parent=0 // pred_check_branch
    %11 = sbr.rel (0) target = $region5
  $region4: #{wrapper_model_normalize.1} parent=0 // pred_region
    _
  $region5: #{wrapper_model_normalize.1} parent=0 // pred_fallthru
    _
  // Predicated region
  $region6: #{wrapper_model_normalize.1} parent=0 // pred_check
    _
  $region7: #{wrapper_model_normalize.1} parent=0 // pred_check_branch
    %13 = sbr.rel (0) target = $region9
  $region8: #{wrapper_model_normalize.1} parent=0 // pred_region
    _
  $region9: #{wrapper_model_normalize.1} parent=0 // pred_fallthru
    _
  // Predicated region
  $region10: #{wrapper_model_normalize.1} parent=0 // pred_check
    _
  $region11: #{wrapper_model_normalize.1} parent=0 // pred_check_branch
    %15 = sbr.rel (0) target = $region13
  $region12: #{wrapper_model_normalize.1} parent=0 // pred_region
    _
  $region13: #{wrapper_model_normalize.1} parent=0 // pred_fallthru
    _
  // Predicated region
  $region14: #{wrapper_model_normalize.1} parent=0 // pred_check
    _
  $region15: #{wrapper_model_normalize.1} parent=0 // pred_check_branch
    %17 = sbr.rel (0) target = $region17
  $region16: #{wrapper_model_normalize.1} parent=0 // pred_region
    _
  $region17: #{wrapper_model_normalize.1} parent=0 // pred_fallthru
    _
  // Predicated region
  $region18: #{wrapper_model_normalize.1} parent=0 // pred_check
    _
  $region19: #{wrapper_model_normalize.1} parent=0 // pred_check_branch
    %19 = sbr.rel (0) target = $region21
  $region20: #{wrapper_model_normalize.1} parent=0 // pred_region
    _
  $region21: #{wrapper_model_normalize.1} parent=0 // pred_fallthru
    _
  %v20 = vld [vmem:[%s1] sm:$0xff]
  %v21 = vld [vmem:[%s1 + $0x8] sm:$0xff]
  %v22 = vld [vmem:[%s1 + $0x10] sm:$0xff]
  %v23 = vld [vmem:[%s1 + $0x18] sm:$0xff]
  %v24 = vld [vmem:[%s0] sm:$0xff]
  %v25 = vld [vmem:[%s0 + $0x8] sm:$0xff]
  %v26 = vld [vmem:[%s0 + $0x10] sm:$0xff]
  %v27 = vld [vmem:[%s0 + $0x18] sm:$0xff]
  %v28 = vld [vmem:[%s0 + $0x20] sm:$0xff]
  %v29 = vld [vmem:[%s0 + $0x28] sm:$0xff]
  %v30 = vld [vmem:[%s0 + $0x30] sm:$0xff]
  %v31 = vld [vmem:[%s0 + $0x38] sm:$0xff]
  %v32 = vld [vmem:[%s0 + $0x40] sm:$0xff]
  %v33 = vld [vmem:[%s0 + $0x48] sm:$0xff]
  %v34 = vld [vmem:[%s0 + $0x50] sm:$0xff]
  %v35 = vld [vmem:[%s0 + $0x58] sm:$0xff]
  %v36 = vld [vmem:[%s0 + $0x60] sm:$0xff]
  %v37 = vld [vmem:[%s0 + $0x68] sm:$0xff]
  %v38 = vld [vmem:[%s0 + $0x70] sm:$0xff]
  %v39 = vld [vmem:[%s0 + $0x78] sm:$0xff]
  %v40 = vld [vmem:[%s0 + $0x80] sm:$0xff]
  %v41 = vld [vmem:[%s0 + $0x88] sm:$0xff]
  %v42 = vld [vmem:[%s0 + $0x90] sm:$0xff]
  %v43 = vld [vmem:[%s0 + $0x98] sm:$0xff]
  %vm44 = vcmask 326656
  %v46 = vsel %vm44, %v20, 0
  %v49 = vsel %vm44, %v21, 0
  %v52 = vsel %vm44, %v22, 0
  %v55 = vsel %vm44, %v23, 0
  %57 = vmatpush.msra.mxu0 0.0
  %58 = vmatpush.msra.mxu0 0.0
  %59 = vmatpush.msra.mxu0 0.0
  %60 = vmatpush.msra.mxu0 0.0
  %61 = vmatpush.msra.mxu0 0.0
  %62 = vmatpush.msra.mxu0 0.0
  %63 = vmatpush.msra.mxu0 0.0
  %64 = vmatpush.msra.mxu0 0.0
  %65 = vmatpush.msra.mxu0 0.0
  %66 = vmatpush.msra.mxu0 0.0
  %67 = vmatpush.msra.mxu0 0.0
  %68 = vmatpush.msra.mxu0 %v40
  %69 = vmatpush.msra.mxu0 %v36
  %70 = vmatpush.msra.mxu0 %v32
  %71 = vmatpush.msra.mxu0 %v28
  %72 = vmatpush.msra.mxu0 %v24
  %73 = vmatmul.f32.gmra.mxu0 %v46
  %v74 = vpop.f32.mrf.mxu0
  %v75 = vadd.f32 0.0, %v74
  %76 = vmatmul.f32.gmra.mxu0 %v49
  %v77 = vpop.f32.mrf.mxu0
  %v78 = vadd.f32 0.0, %v77
  %79 = vmatmul.f32.gmra.mxu0 %v52
  %v80 = vpop.f32.mrf.mxu0
  %v81 = vadd.f32 0.0, %v80
  %82 = vmatmul.f32.gmra.mxu0 %v55
  %v83 = vpop.f32.mrf.mxu0
  %v84 = vadd.f32 0.0, %v83
  %85 = vdwg.mxu0
  %86 = vmatpush.msra.mxu0 0.0
  %87 = vmatpush.msra.mxu0 0.0
  %88 = vmatpush.msra.mxu0 0.0
  %89 = vmatpush.msra.mxu0 0.0
  %90 = vmatpush.msra.mxu0 0.0
  %91 = vmatpush.msra.mxu0 0.0
  %92 = vmatpush.msra.mxu0 0.0
  %93 = vmatpush.msra.mxu0 0.0
  %94 = vmatpush.msra.mxu0 0.0
  %95 = vmatpush.msra.mxu0 0.0
  %96 = vmatpush.msra.mxu0 0.0
  %97 = vmatpush.msra.mxu0 %v41
  %98 = vmatpush.msra.mxu0 %v37
  %99 = vmatpush.msra.mxu0 %v33
  %100 = vmatpush.msra.mxu0 %v29
  %101 = vmatpush.msra.mxu0 %v25
  %102 = vmatmul.f32.gmra.mxu0 %v46
  %v103 = vpop.f32.mrf.mxu0
  %v104 = vadd.f32 0.0, %v103
  %105 = vmatmul.f32.gmra.mxu0 %v49
  %v106 = vpop.f32.mrf.mxu0
  %v107 = vadd.f32 0.0, %v106
  %108 = vmatmul.f32.gmra.mxu0 %v52
  %v109 = vpop.f32.mrf.mxu0
  %v110 = vadd.f32 0.0, %v109
  %111 = vmatmul.f32.gmra.mxu0 %v55
  %v112 = vpop.f32.mrf.mxu0
  %v113 = vadd.f32 0.0, %v112
  %114 = vdwg.mxu0
  %115 = vmatpush.msra.mxu0 0.0
  %116 = vmatpush.msra.mxu0 0.0
  %117 = vmatpush.msra.mxu0 0.0
  %118 = vmatpush.msra.mxu0 0.0
  %119 = vmatpush.msra.mxu0 0.0
  %120 = vmatpush.msra.mxu0 0.0
  %121 = vmatpush.msra.mxu0 0.0
  %122 = vmatpush.msra.mxu0 0.0
  %123 = vmatpush.msra.mxu0 0.0
  %124 = vmatpush.msra.mxu0 0.0
  %125 = vmatpush.msra.mxu0 0.0
  %126 = vmatpush.msra.mxu0 %v42
  %127 = vmatpush.msra.mxu0 %v38
  %128 = vmatpush.msra.mxu0 %v34
  %129 = vmatpush.msra.mxu0 %v30
  %130 = vmatpush.msra.mxu0 %v26
  %131 = vmatmul.f32.gmra.mxu0 %v46
  %v132 = vpop.f32.mrf.mxu0
  %v133 = vadd.f32 0.0, %v132
  %134 = vmatmul.f32.gmra.mxu0 %v49
  %v135 = vpop.f32.mrf.mxu0
  %v136 = vadd.f32 0.0, %v135
  %137 = vmatmul.f32.gmra.mxu0 %v52
  %v138 = vpop.f32.mrf.mxu0
  %v139 = vadd.f32 0.0, %v138
  %140 = vmatmul.f32.gmra.mxu0 %v55
  %v141 = vpop.f32.mrf.mxu0
  %v142 = vadd.f32 0.0, %v141
  %143 = vdwg.mxu0
  %144 = vmatpush.msra.mxu0 0.0
  %145 = vmatpush.msra.mxu0 0.0
  %146 = vmatpush.msra.mxu0 0.0
  %147 = vmatpush.msra.mxu0 0.0
  %148 = vmatpush.msra.mxu0 0.0
  %149 = vmatpush.msra.mxu0 0.0
  %150 = vmatpush.msra.mxu0 0.0
  %151 = vmatpush.msra.mxu0 0.0
  %152 = vmatpush.msra.mxu0 0.0
  %153 = vmatpush.msra.mxu0 0.0
  %154 = vmatpush.msra.mxu0 0.0
  %155 = vmatpush.msra.mxu0 %v43
  %156 = vmatpush.msra.mxu0 %v39
  %157 = vmatpush.msra.mxu0 %v35
  %158 = vmatpush.msra.mxu0 %v31
  %159 = vmatpush.msra.mxu0 %v27
  %160 = vmatmul.f32.gmra.mxu0 %v46
  %v161 = vpop.f32.mrf.mxu0
  %v162 = vadd.f32 0.0, %v161
  %163 = vmatmul.f32.gmra.mxu0 %v49
  %v164 = vpop.f32.mrf.mxu0
  %v165 = vadd.f32 0.0, %v164
  %166 = vmatmul.f32.gmra.mxu0 %v52
  %v167 = vpop.f32.mrf.mxu0
  %v168 = vadd.f32 0.0, %v167
  %169 = vmatmul.f32.gmra.mxu0 %v55
  %v170 = vpop.f32.mrf.mxu0
  %v171 = vadd.f32 0.0, %v170
  %172 = vdwg.mxu0
  %v173 = vmax.f32 %v75, 0.0
  %v174 = vmax.f32 %v104, 0.0
  %v175 = vmax.f32 %v133, 0.0
  %v176 = vmax.f32 %v162, 0.0
  %v177 = vmax.f32 %v78, 0.0
  %v178 = vmax.f32 %v107, 0.0
  %v179 = vmax.f32 %v136, 0.0
  %v180 = vmax.f32 %v165, 0.0
  %v181 = vmax.f32 %v81, 0.0
  %v182 = vmax.f32 %v110, 0.0
  %v183 = vmax.f32 %v139, 0.0
  %v184 = vmax.f32 %v168, 0.0
  %v185 = vmax.f32 %v84, 0.0
  %v186 = vmax.f32 %v113, 0.0
  %v187 = vmax.f32 %v142, 0.0
  %v188 = vmax.f32 %v171, 0.0
  %v189 = vld [vmem:[%s2] sm:$0xff]
  %v190 = vld [vmem:[%s2 + $0x8] sm:$0xff]
  %v191 = vld [vmem:[%s2 + $0x10] sm:$0xff]
  %v192 = vld [vmem:[%s2 + $0x18] sm:$0xff]
  %v193 = vld [vmem:[%s2 + $0x20] sm:$0xff]
  %v194 = vld [vmem:[%s2 + $0x28] sm:$0xff]
  %v195 = vld [vmem:[%s2 + $0x30] sm:$0xff]
  %v196 = vld [vmem:[%s2 + $0x38] sm:$0xff]
  %v197 = vld [vmem:[%s2 + $0x40] sm:$0xff]
  %v198 = vld [vmem:[%s2 + $0x48] sm:$0xff]
  %v199 = vld [vmem:[%s2 + $0x50] sm:$0xff]
  %v200 = vld [vmem:[%s2 + $0x58] sm:$0xff]
  %v201 = vld [vmem:[%s2 + $0x60] sm:$0xff]
  %v202 = vld [vmem:[%s2 + $0x68] sm:$0xff]
  %v203 = vld [vmem:[%s2 + $0x70] sm:$0xff]
  %v204 = vld [vmem:[%s2 + $0x78] sm:$0xff]
  %v205 = vld [vmem:[%s2 + $0x80] sm:$0xff]
  %v206 = vld [vmem:[%s2 + $0x88] sm:$0xff]
  %v207 = vld [vmem:[%s2 + $0x90] sm:$0xff]
  %v208 = vld [vmem:[%s2 + $0x98] sm:$0xff]
  %v209 = vld [vmem:[%s2 + $0xa0] sm:$0xff]
  %v210 = vld [vmem:[%s2 + $0xa8] sm:$0xff]
  %v211 = vld [vmem:[%s2 + $0xb0] sm:$0xff]
  %v212 = vld [vmem:[%s2 + $0xb8] sm:$0xff]
  %v213 = vld [vmem:[%s2 + $0xc0] sm:$0xff]
  %v214 = vld [vmem:[%s2 + $0xc8] sm:$0xff]
  %v215 = vld [vmem:[%s2 + $0xd0] sm:$0xff]
  %v216 = vld [vmem:[%s2 + $0xd8] sm:$0xff]
  %v217 = vld [vmem:[%s2 + $0xe0] sm:$0xff]
  %v218 = vld [vmem:[%s2 + $0xe8] sm:$0xff]
  %v219 = vld [vmem:[%s2 + $0xf0] sm:$0xff]
  %v220 = vld [vmem:[%s2 + $0xf8] sm:$0xff]
  %v221 = vld [vmem:[%s2 + $0x100] sm:$0xff]
  %v222 = vld [vmem:[%s2 + $0x108] sm:$0xff]
  %v223 = vld [vmem:[%s2 + $0x110] sm:$0xff]
  %v224 = vld [vmem:[%s2 + $0x118] sm:$0xff]
  %v225 = vld [vmem:[%s2 + $0x120] sm:$0xff]
  %v226 = vld [vmem:[%s2 + $0x128] sm:$0xff]
  %v227 = vld [vmem:[%s2 + $0x130] sm:$0xff]
  %v228 = vld [vmem:[%s2 + $0x138] sm:$0xff]
  %v229 = vld [vmem:[%s2 + $0x140] sm:$0xff]
  %v230 = vld [vmem:[%s2 + $0x148] sm:$0xff]
  %v231 = vld [vmem:[%s2 + $0x150] sm:$0xff]
  %v232 = vld [vmem:[%s2 + $0x158] sm:$0xff]
  %v233 = vld [vmem:[%s2 + $0x160] sm:$0xff]
  %v234 = vld [vmem:[%s2 + $0x168] sm:$0xff]
  %v235 = vld [vmem:[%s2 + $0x170] sm:$0xff]
  %v236 = vld [vmem:[%s2 + $0x178] sm:$0xff]
  %v237 = vld [vmem:[%s2 + $0x180] sm:$0xff]
  %v238 = vld [vmem:[%s2 + $0x188] sm:$0xff]
  %v239 = vld [vmem:[%s2 + $0x190] sm:$0xff]
  %v240 = vld [vmem:[%s2 + $0x198] sm:$0xff]
  %v241 = vld [vmem:[%s2 + $0x1a0] sm:$0xff]
  %v242 = vld [vmem:[%s2 + $0x1a8] sm:$0xff]
  %v243 = vld [vmem:[%s2 + $0x1b0] sm:$0xff]
  %v244 = vld [vmem:[%s2 + $0x1b8] sm:$0xff]
  %v245 = vld [vmem:[%s2 + $0x1c0] sm:$0xff]
  %v246 = vld [vmem:[%s2 + $0x1c8] sm:$0xff]
  %v247 = vld [vmem:[%s2 + $0x1d0] sm:$0xff]
  %v248 = vld [vmem:[%s2 + $0x1d8] sm:$0xff]
  %v249 = vld [vmem:[%s2 + $0x1e0] sm:$0xff]
  %v250 = vld [vmem:[%s2 + $0x1e8] sm:$0xff]
  %v251 = vld [vmem:[%s2 + $0x1f0] sm:$0xff]
  %v252 = vld [vmem:[%s2 + $0x1f8] sm:$0xff]
  %253 = vmatpush.msra.mxu0 %v204
  %254 = vmatpush.msra.mxu0 %v203
  %255 = vmatpush.msra.mxu0 %v202
  %256 = vmatpush.msra.mxu0 %v201
  %257 = vmatpush.msra.mxu0 %v200
  %258 = vmatpush.msra.mxu0 %v199
  %259 = vmatpush.msra.mxu0 %v198
  %260 = vmatpush.msra.mxu0 %v197
  %261 = vmatpush.msra.mxu0 %v196
  %262 = vmatpush.msra.mxu0 %v195
  %263 = vmatpush.msra.mxu0 %v194
  %264 = vmatpush.msra.mxu0 %v193
  %265 = vmatpush.msra.mxu0 %v192
  %266 = vmatpush.msra.mxu0 %v191
  %267 = vmatpush.msra.mxu0 %v190
  %268 = vmatpush.msra.mxu0 %v189
  %269 = vmatmul.f32.gmra.mxu0 %v173
  %v270 = vpop.f32.mrf.mxu0
  %v271 = vadd.f32 0.0, %v270
  %272 = vmatmul.f32.gmra.mxu0 %v177
  %v273 = vpop.f32.mrf.mxu0
  %v274 = vadd.f32 0.0, %v273
  %275 = vmatmul.f32.gmra.mxu0 %v181
  %v276 = vpop.f32.mrf.mxu0
  %v277 = vadd.f32 0.0, %v276
  %278 = vmatmul.f32.gmra.mxu0 %v185
  %v279 = vpop.f32.mrf.mxu0
  %v280 = vadd.f32 0.0, %v279
  %281 = vdwg.mxu0
  %282 = vmatpush.msra.mxu0 %v220
  %283 = vmatpush.msra.mxu0 %v219
  %284 = vmatpush.msra.mxu0 %v218
  %285 = vmatpush.msra.mxu0 %v217
  %286 = vmatpush.msra.mxu0 %v216
  %287 = vmatpush.msra.mxu0 %v215
  %288 = vmatpush.msra.mxu0 %v214
  %289 = vmatpush.msra.mxu0 %v213
  %290 = vmatpush.msra.mxu0 %v212
  %291 = vmatpush.msra.mxu0 %v211
  %292 = vmatpush.msra.mxu0 %v210
  %293 = vmatpush.msra.mxu0 %v209
  %294 = vmatpush.msra.mxu0 %v208
  %295 = vmatpush.msra.mxu0 %v207
  %296 = vmatpush.msra.mxu0 %v206
  %297 = vmatpush.msra.mxu0 %v205
  %298 = vmatmul.f32.gmra.mxu0 %v174
  %v299 = vpop.f32.mrf.mxu0
  %v300 = vadd.f32 %v271, %v299
  %301 = vmatmul.f32.gmra.mxu0 %v178
  %v302 = vpop.f32.mrf.mxu0
  %v303 = vadd.f32 %v274, %v302
  %304 = vmatmul.f32.gmra.mxu0 %v182
  %v305 = vpop.f32.mrf.mxu0
  %v306 = vadd.f32 %v277, %v305
  %307 = vmatmul.f32.gmra.mxu0 %v186
  %v308 = vpop.f32.mrf.mxu0
  %v309 = vadd.f32 %v280, %v308
  %310 = vdwg.mxu0
  %311 = vmatpush.msra.mxu0 %v236
  %312 = vmatpush.msra.mxu0 %v235
  %313 = vmatpush.msra.mxu0 %v234
  %314 = vmatpush.msra.mxu0 %v233
  %315 = vmatpush.msra.mxu0 %v232
  %316 = vmatpush.msra.mxu0 %v231
  %317 = vmatpush.msra.mxu0 %v230
  %318 = vmatpush.msra.mxu0 %v229
  %319 = vmatpush.msra.mxu0 %v228
  %320 = vmatpush.msra.mxu0 %v227
  %321 = vmatpush.msra.mxu0 %v226
  %322 = vmatpush.msra.mxu0 %v225
  %323 = vmatpush.msra.mxu0 %v224
  %324 = vmatpush.msra.mxu0 %v223
  %325 = vmatpush.msra.mxu0 %v222
  %326 = vmatpush.msra.mxu0 %v221
  %327 = vmatmul.f32.gmra.mxu0 %v175
  %v328 = vpop.f32.mrf.mxu0
  %v329 = vadd.f32 %v300, %v328
  %330 = vmatmul.f32.gmra.mxu0 %v179
  %v331 = vpop.f32.mrf.mxu0
  %v332 = vadd.f32 %v303, %v331
  %333 = vmatmul.f32.gmra.mxu0 %v183
  %v334 = vpop.f32.mrf.mxu0
  %v335 = vadd.f32 %v306, %v334
  %336 = vmatmul.f32.gmra.mxu0 %v187
  %v337 = vpop.f32.mrf.mxu0
  %v338 = vadd.f32 %v309, %v337
  %339 = vdwg.mxu0
  %340 = vmatpush.msra.mxu0 %v252
  %341 = vmatpush.msra.mxu0 %v251
  %342 = vmatpush.msra.mxu0 %v250
  %343 = vmatpush.msra.mxu0 %v249
  %344 = vmatpush.msra.mxu0 %v248
  %345 = vmatpush.msra.mxu0 %v247
  %346 = vmatpush.msra.mxu0 %v246
  %347 = vmatpush.msra.mxu0 %v245
  %348 = vmatpush.msra.mxu0 %v244
  %349 = vmatpush.msra.mxu0 %v243
  %350 = vmatpush.msra.mxu0 %v242
  %351 = vmatpush.msra.mxu0 %v241
  %352 = vmatpush.msra.mxu0 %v240
  %353 = vmatpush.msra.mxu0 %v239
  %354 = vmatpush.msra.mxu0 %v238
  %355 = vmatpush.msra.mxu0 %v237
  %356 = vmatmul.f32.gmra.mxu0 %v176
  %v357 = vpop.f32.mrf.mxu0
  %v358 = vadd.f32 %v329, %v357
  %359 = vmatmul.f32.gmra.mxu0 %v180
  %v360 = vpop.f32.mrf.mxu0
  %v361 = vadd.f32 %v332, %v360
  %362 = vmatmul.f32.gmra.mxu0 %v184
  %v363 = vpop.f32.mrf.mxu0
  %v364 = vadd.f32 %v335, %v363
  %365 = vmatmul.f32.gmra.mxu0 %v188
  %v366 = vpop.f32.mrf.mxu0
  %v367 = vadd.f32 %v338, %v366
  %368 = vdwg.mxu0
  %v369 = vld [vmem:[%s3] sm:$0xff]
  %v370 = vld [vmem:[%s4] sm:$0xff]
  %372 = vset.pattern.permute.xlu0 0
  %373 = vperm.xlu0 %372, %v370
  %v374 = vpop.permute.xlu0 %373
  %vm376 = vcmask 261120
  %v378 = vsel %vm376, %v369, 0
  %380 = vmatpush.msra.mxu0 0.0
  %381 = vmatpush.msra.mxu0 0.0
  %382 = vmatpush.msra.mxu0 0.0
  %383 = vmatpush.msra.mxu0 0.0
  %384 = vmatpush.msra.mxu0 0.0
  %385 = vmatpush.msra.mxu0 0.0
  %386 = vmatpush.msra.mxu0 0.0
  %387 = vmatpush.msra.mxu0 0.0
  %388 = vmatpush.msra.mxu0 0.0
  %389 = vmatpush.msra.mxu0 0.0
  %390 = vmatpush.msra.mxu0 0.0
  %391 = vmatpush.msra.mxu0 0.0
  %392 = vmatpush.msra.mxu0 %v367
  %393 = vmatpush.msra.mxu0 %v364
  %394 = vmatpush.msra.mxu0 %v361
  %395 = vmatpush.msra.mxu0 %v358
  %396 = vmatmul.f32.gmra.mxu0 %v378
  %v397 = vpop.f32.mrf.mxu0
  %v398 = vadd.f32 %v374, %v397
  %399 = vdwg.mxu0
  %400 = vst [vmem:[%s5] sm:$0xff] %v398
  // Predicated region
  $region22: #{wrapper_model_normalize.1} parent=0 // pred_check
    _
  $region23: #{wrapper_model_normalize.1} parent=0 // pred_check_branch
    %402 = sbr.rel (0) target = $region25
  $region24: #{wrapper_model_normalize.1} parent=0 // pred_region
    _
  $region25: #{wrapper_model_normalize.1} parent=0 // pred_fallthru
    _
  // Predicated region
  $region26: #{wrapper_model_normalize.1} parent=0 // pred_check
    _
  $region27: #{wrapper_model_normalize.1} parent=0 // pred_check_branch
    %404 = sbr.rel (0) target = $region29
  $region28: #{wrapper_model_normalize.1} parent=0 // pred_region
    _
  $region29: #{wrapper_model_normalize.1} parent=0 // pred_fallthru
    _

</llo_original>
